<compile_context>
chip_gen: v7x
topology: tpu7x:2x2x1
jax: 0.10.0
libtpu: 0.0.40
codegen_flags: <defaults>
</compile_context>

<pallas_src>
import jax
import jax.numpy as jnp
from jax.experimental import pallas as pl
from jax.experimental.pallas import tpu as pltpu

IGNORE_INDEX = -100       # CELCLoss default
_PAD_LOGIT = -1e9         # pad value: exp(pad - m) == 0, never the running max


def _ceil_to(x, m):
    return ((x + m - 1) // m) * m


def _celc_loss_kernel(lcd_ref,                       # (1,) f32 scalar-prefetch (SMEM)
                      n_ref, b_ref, t_ref,           # (tn,tc), (tn,tc), (tn,1) VMEM
                      out_ref,                       # (1,1) f32 VMEM
                      m_ref, s_ref, picked_ref, cnt_ref):   # (1,1) f32 VMEM scratch
    i = pl.program_id(0)          # row-block index
    j = pl.program_id(1)          # class-block index (reduction, innermost)
    ni = pl.num_programs(0)
    nj = pl.num_programs(1)

    @pl.when(jnp.logical_and(i == 0, j == 0))
    def _init():
        m_ref[...] = jnp.full((1, 1), -jnp.inf, jnp.float32)
        s_ref[...] = jnp.zeros((1, 1), jnp.float32)
        picked_ref[...] = jnp.zeros((1, 1), jnp.float32)
        cnt_ref[...] = jnp.zeros((1, 1), jnp.float32)

    lcd = lcd_ref[0]
    # Stream native dtype from HBM; upcast to f32 only inside the kernel
    # (keeps v5e's f32-only VPU/EUP happy while halving HBM traffic for bf16).
    xn = n_ref[...].astype(jnp.float32)
    xb = b_ref[...].astype(jnp.float32)
    w = xn + lcd * (xn - xb)                          # shift-free calibrated logits

    # ---- online (rescaled) GLOBAL log-sum-exp over w --------------------------
    m_old = m_ref[...]                                # (1,1)
    m_new = jnp.maximum(m_old, jnp.max(w))            # (1,1)
    s_ref[...] = s_ref[...] * jnp.exp(m_old - m_new) + jnp.sum(jnp.exp(w - m_new))
    m_ref[...] = m_new

    # ---- gather w[i, target[i]] via mask-select (no onehot, no logp) ----------
    tgt = t_ref[...]                                  # (tn, 1) int32
    tn, tc = w.shape
    cls = j * tc + jax.lax.broadcasted_iota(jnp.int32, (tn, tc), 1)
    # ignore_index (-100) and padded rows/columns never match cls >= 0, so no
    # explicit validity mask is needed on the numerator.
    picked_ref[...] += jnp.sum(jnp.where(cls == tgt, w, 0.0))

    @pl.when(j == 0)  # count each row exactly once
    def _count():
        cnt_ref[...] += jnp.sum((tgt != IGNORE_INDEX).astype(jnp.float32))

    # ---- finalize scalar loss at the last grid step ---------------------------
    @pl.when(jnp.logical_and(i == ni - 1, j == nj - 1))
    def _finalize():
        log_z = m_ref[...] + jnp.log(s_ref[...])
        out_ref[...] = log_z - picked_ref[...] / cnt_ref[...]   # reduction='mean'


def celc_loss_pallas(input_n, input_b, target, logits_calibration_degree,
                     *, tile_n=256, tile_c=2048):
    """CELCLoss forward (weight=None, ignore_index=-100, reduction='mean').

    input_n/input_b: (N, C), any float dtype (streamed natively, f32 compute).
    target: (N,) int, values in [0, C) or ignore_index. Returns scalar f32.
    """
    N, C = input_n.shape

    # Hardware-friendly tiles: sublane multiple of 8, lane multiple of 128,
    # clamped to the (padded) problem size. Defaults keep 2 inputs x 2 pipeline
    # buffers well under the 16/32 MiB scoped-VMEM defaults (v5e/v6e/v7x).
    tile_n = max(8, (tile_n // 8) * 8)
    tile_c = max(128, (tile_c // 128) * 128)
    tile_n = min(tile_n, _ceil_to(N, 8))
    tile_c = min(tile_c, _ceil_to(C, 128))
    Np = _ceil_to(N, tile_n)
    Cp = _ceil_to(C, tile_c)

    if (Np, Cp) != (N, C):
        input_n = jnp.pad(input_n, ((0, Np - N), (0, Cp - C)),
                          constant_values=_PAD_LOGIT)
        input_b = jnp.pad(input_b, ((0, Np - N), (0, Cp - C)),
                          constant_values=_PAD_LOGIT)
    tgt = target.astype(jnp.int32)
    if Np != N:
        tgt = jnp.pad(tgt, (0, Np - N), constant_values=IGNORE_INDEX)
    tgt2d = tgt.reshape(Np, 1)

    lcd_arr = jnp.asarray(logits_calibration_degree, jnp.float32).reshape(1)

    grid = (Np // tile_n, Cp // tile_c)

    # TODO(synk): on v7x, split the row axis across the 2 TensorCores
    # (per-core partial (m, s, picked, cnt) outputs combined in the wrapper).
    out = pl.pallas_call(
        _celc_loss_kernel,
        out_shape=jax.ShapeDtypeStruct((1, 1), jnp.float32),
        grid_spec=pltpu.PrefetchScalarGridSpec(
            num_scalar_prefetch=1,                   # lcd scalar lives in SMEM
            grid=grid,
            in_specs=[
                pl.BlockSpec((tile_n, tile_c), lambda i, j, lcd: (i, j)),
                pl.BlockSpec((tile_n, tile_c), lambda i, j, lcd: (i, j)),
                pl.BlockSpec((tile_n, 1), lambda i, j, lcd: (i, 0)),
            ],
            out_specs=pl.BlockSpec((1, 1), lambda i, j, lcd: (0, 0)),
            scratch_shapes=[
                pltpu.VMEM((1, 1), jnp.float32),     # running max of w
                pltpu.VMEM((1, 1), jnp.float32),     # running sum exp(w - m)
                pltpu.VMEM((1, 1), jnp.float32),     # sum of gathered w
                pltpu.VMEM((1, 1), jnp.float32),     # valid-target count
            ],
        ),
        compiler_params=pltpu.CompilerParams(
            # both axes carry the streaming accumulators -> sequential
            dimension_semantics=("arbitrary", "arbitrary"),
            vmem_limit_bytes=32 * 1024 * 1024,
        ),
    )(lcd_arr, input_n, input_b, tgt2d)
    return out[0, 0]


def _celc_loss_ref(input_n, input_b, target, lcd):
    """Pure-JAX reference mirroring the PyTorch code exactly (for checking)."""
    xn = input_n.astype(jnp.float32)
    xb = input_b.astype(jnp.float32)
    a = xn - jnp.max(xn)
    b = xb - jnp.max(xb)
    z = a + lcd * (a - b)
    logp = z - jnp.log(jnp.sum(jnp.exp(z)))
    valid = target != IGNORE_INDEX
    safe_t = jnp.where(valid, target, 0).astype(jnp.int32)
    picked = jnp.take_along_axis(logp, safe_t[:, None], axis=1)[:, 0]
    num = jnp.sum(jnp.where(valid, -picked, 0.0))
    den = jnp.sum(valid.astype(jnp.float32))
    return num / den


if __name__ == "__main__":
    key = jax.random.PRNGKey(0)
    k_n, k_b, k_t, k_l = jax.random.split(key, 4)

    N, C = 12, 300   # small (minibatch, num_classes); non-multiples exercise padding
    input_n = jax.random.normal(k_n, (N, C), dtype=jnp.float32)
    input_b = jax.random.normal(k_b, (N, C), dtype=jnp.float32)
    target = jax.random.randint(k_t, (N,), 0, C, dtype=jnp.int32)
    target = target.at[3].set(IGNORE_INDEX)              # exercise ignore_index
    lcd = jax.random.uniform(k_l, (), dtype=jnp.float32)  # logits_calibration_degree

    # 1) small tiles -> multi-step (2 x 3) grid exercises the streaming
    #    online-LSE / picked / count accumulators.
    loss = celc_loss_pallas(input_n, input_b, target, lcd, tile_n=8, tile_c=128)
    loss = jax.block_until_ready(loss)
    ref = _celc_loss_ref(input_n, input_b, target, lcd)
    assert jnp.allclose(loss, ref, rtol=1e-5, atol=1e-5), (loss, ref)

    # 2) native-dtype (bf16) streaming with default tile sizes.
    loss_bf16 = celc_loss_pallas(input_n.astype(jnp.bfloat16),
                                 input_b.astype(jnp.bfloat16), target, lcd)
    loss_bf16 = jax.block_until_ready(loss_bf16)
    ref_bf16 = _celc_loss_ref(input_n.astype(jnp.bfloat16),
                              input_b.astype(jnp.bfloat16), target, lcd)
    assert jnp.allclose(loss_bf16, ref_bf16, rtol=1e-4, atol=1e-4), (loss_bf16, ref_bf16)

    print("KERNEL_OK")
</pallas_src>

<mosaic_0001>
module attributes {stable_mosaic.version = 11 : i64} {
  func.func @_celc_loss_kernel(%arg0: i32, %arg1: i32, %arg2: memref<1xf32, #tpu.memory_space<smem>>, %arg3: memref<8x128xf32, #tpu.memory_space<vmem>>, %arg4: memref<8x128xf32, #tpu.memory_space<vmem>>, %arg5: memref<8x1xi32, #tpu.memory_space<vmem>>, %arg6: memref<1x1xf32, #tpu.memory_space<vmem>>, %arg7: memref<1x1xf32, #tpu.memory_space<vmem>>, %arg8: memref<1x1xf32, #tpu.memory_space<vmem>>, %arg9: memref<1x1xf32, #tpu.memory_space<vmem>>, %arg10: memref<1x1xf32, #tpu.memory_space<vmem>>) attributes {dimension_semantics = [#tpu.dimension_semantics<arbitrary>, #tpu.dimension_semantics<arbitrary>], iteration_bounds = array<i64: 2, 3>, scalar_prefetch = 1 : i64, scratch_operands = 4 : i64, tpu.core_type = #tpu.core_type<tc>, window_params = [{transform_indices = @transform_0, window_bounds = array<i64: 8, 128>}, {transform_indices = @transform_1, window_bounds = array<i64: 8, 128>}, {transform_indices = @transform_2, window_bounds = array<i64: 8, 1>}, {pipeline_mode = #tpu.pipeline_mode<synchronous>, transform_indices = @transform_3, window_bounds = array<i64: 1, 1>}]} {
    %c0_i32 = arith.constant 0 : i32
    %0 = arith.cmpi eq, %arg0, %c0_i32 : i32
    %c0_i32_0 = arith.constant 0 : i32
    %1 = arith.cmpi eq, %arg1, %c0_i32_0 : i32
    %2 = arith.andi %0, %1 : i1
    %3 = arith.extui %2 : i1 to i32
    %c0_i32_1 = arith.constant 0 : i32
    %4 = arith.cmpi ne, %3, %c0_i32_1 : i32
    scf.if %4 {
      %cst_26 = arith.constant 0xFF800000 : f32
      %59 = vector.broadcast %cst_26 : f32 to vector<1x1xf32>
      %c0_27 = arith.constant 0 : index
      %c0_28 = arith.constant 0 : index
      %60 = vector.load %arg7[%c0_27, %c0_28] : memref<1x1xf32, #tpu.memory_space<vmem>>, vector<1x1xf32>
      tpu.vector_store %arg7[%c0_27, %c0_28], %59 {strides = array<i32>} : memref<1x1xf32, #tpu.memory_space<vmem>>, vector<1x1xf32>,
      %cst_29 = arith.constant 0.000000e+00 : f32
      %61 = vector.broadcast %cst_29 : f32 to vector<1x1xf32>
      %c0_30 = arith.constant 0 : index
      %c0_31 = arith.constant 0 : index
      %62 = vector.load %arg8[%c0_30, %c0_31] : memref<1x1xf32, #tpu.memory_space<vmem>>, vector<1x1xf32>
      tpu.vector_store %arg8[%c0_30, %c0_31], %61 {strides = array<i32>} : memref<1x1xf32, #tpu.memory_space<vmem>>, vector<1x1xf32>,
      %cst_32 = arith.constant 0.000000e+00 : f32
      %63 = vector.broadcast %cst_32 : f32 to vector<1x1xf32>
      %c0_33 = arith.constant 0 : index
      %c0_34 = arith.constant 0 : index
      %64 = vector.load %arg9[%c0_33, %c0_34] : memref<1x1xf32, #tpu.memory_space<vmem>>, vector<1x1xf32>
      tpu.vector_store %arg9[%c0_33, %c0_34], %63 {strides = array<i32>} : memref<1x1xf32, #tpu.memory_space<vmem>>, vector<1x1xf32>,
      %cst_35 = arith.constant 0.000000e+00 : f32
      %65 = vector.broadcast %cst_35 : f32 to vector<1x1xf32>
      %c0_36 = arith.constant 0 : index
      %c0_37 = arith.constant 0 : index
      %66 = vector.load %arg10[%c0_36, %c0_37] : memref<1x1xf32, #tpu.memory_space<vmem>>, vector<1x1xf32>
      tpu.vector_store %arg10[%c0_36, %c0_37], %65 {strides = array<i32>} : memref<1x1xf32, #tpu.memory_space<vmem>>, vector<1x1xf32>,
    } else {
    }
    %c0 = arith.constant 0 : index
    %5 = memref.load %arg2[%c0] : memref<1xf32, #tpu.memory_space<smem>>
    %c0_2 = arith.constant 0 : index
    %c0_3 = arith.constant 0 : index
    %6 = vector.load %arg3[%c0_2, %c0_3] : memref<8x128xf32, #tpu.memory_space<vmem>>, vector<8x128xf32>
    %c0_4 = arith.constant 0 : index
    %c0_5 = arith.constant 0 : index
    %7 = vector.load %arg4[%c0_4, %c0_5] : memref<8x128xf32, #tpu.memory_space<vmem>>, vector<8x128xf32>
    %8 = arith.subf %6, %7 : vector<8x128xf32>
    %9 = vector.broadcast %5 : f32 to vector<8x128xf32>
    %10 = arith.mulf %9, %8 : vector<8x128xf32>
    %11 = arith.addf %6, %10 : vector<8x128xf32>
    %c0_6 = arith.constant 0 : index
    %c0_7 = arith.constant 0 : index
    %12 = vector.load %arg7[%c0_6, %c0_7] : memref<1x1xf32, #tpu.memory_space<vmem>>, vector<1x1xf32>
    %13 = vector.shape_cast %11 : vector<8x128xf32> to vector<1x8x128xf32>
    %cst = arith.constant dense<0xFF800000> : vector<1xf32>
    %14 = vector.multi_reduction <maximumf>, %13, %cst [1, 2] : vector<1x8x128xf32> to vector<1xf32>
    %15 = vector.shape_cast %14 : vector<1xf32> to vector<1x1x1xf32>
    %16 = vector.extract %15[0, 0, 0] : f32 from vector<1x1x1xf32>
    %17 = vector.broadcast %16 : f32 to vector<1x1xf32>
    %18 = arith.maximumf %12, %17 : vector<1x1xf32>
    %c0_8 = arith.constant 0 : index
    %c0_9 = arith.constant 0 : index
    %19 = vector.load %arg8[%c0_8, %c0_9] : memref<1x1xf32, #tpu.memory_space<vmem>>, vector<1x1xf32>
    %20 = arith.subf %12, %18 : vector<1x1xf32>
    %21 = math.exp %20 : vector<1x1xf32>
    %22 = arith.mulf %19, %21 : vector<1x1xf32>
    %23 = vector.broadcast %18 : vector<1x1xf32> to vector<8x128xf32>
    %24 = arith.subf %11, %23 : vector<8x128xf32>
    %25 = math.exp %24 : vector<8x128xf32>
    %26 = vector.shape_cast %25 : vector<8x128xf32> to vector<1x8x128xf32>
    %cst_10 = arith.constant dense<0.000000e+00> : vector<1xf32>
    %27 = vector.multi_reduction <add>, %26, %cst_10 [1, 2] : vector<1x8x128xf32> to vector<1xf32>
    %28 = vector.shape_cast %27 : vector<1xf32> to vector<1x1x1xf32>
    %29 = vector.extract %28[0, 0, 0] : f32 from vector<1x1x1xf32>
    %30 = vector.broadcast %29 : f32 to vector<1x1xf32>
    %31 = arith.addf %22, %30 : vector<1x1xf32>
    %c0_11 = arith.constant 0 : index
    %c0_12 = arith.constant 0 : index
    %32 = vector.load %arg8[%c0_11, %c0_12] : memref<1x1xf32, #tpu.memory_space<vmem>>, vector<1x1xf32>
    tpu.vector_store %arg8[%c0_11, %c0_12], %31 {strides = array<i32>} : memref<1x1xf32, #tpu.memory_space<vmem>>, vector<1x1xf32>,
    %c0_13 = arith.constant 0 : index
    %c0_14 = arith.constant 0 : index
    %33 = vector.load %arg7[%c0_13, %c0_14] : memref<1x1xf32, #tpu.memory_space<vmem>>, vector<1x1xf32>
    tpu.vector_store %arg7[%c0_13, %c0_14], %18 {strides = array<i32>} : memref<1x1xf32, #tpu.memory_space<vmem>>, vector<1x1xf32>,
    %c0_15 = arith.constant 0 : index
    %c0_16 = arith.constant 0 : index
    %34 = vector.load %arg5[%c0_15, %c0_16] : memref<8x1xi32, #tpu.memory_space<vmem>>, vector<8x1xi32>
    %c128_i32 = arith.constant 128 : i32
    %35 = arith.muli %arg1, %c128_i32 : i32
    %36 = tpu.iota {dimensions = array<i32: 1>} : vector<8x128xi32>
    %37 = vector.broadcast %35 : i32 to vector<8x128xi32>
    %38 = arith.addi %37, %36 : vector<8x128xi32>
    %c0_17 = arith.constant 0 : index
    %c0_18 = arith.constant 0 : index
    %39 = vector.load %arg9[%c0_17, %c0_18] : memref<1x1xf32, #tpu.memory_space<vmem>>, vector<1x1xf32>
    %40 = vector.broadcast %34 : vector<8x1xi32> to vector<8x128xi32>
    %41 = arith.cmpi eq, %38, %40 : vector<8x128xi32>
    %cst_19 = arith.constant 0.000000e+00 : f32
    %42 = vector.broadcast %cst_19 : f32 to vector<8x128xf32>
    %43 = arith.select %41, %11, %42 : vector<8x128xi1>, vector<8x128xf32>
    %44 = vector.shape_cast %43 : vector<8x128xf32> to vector<1x8x128xf32>
    %cst_20 = arith.constant dense<0.000000e+00> : vector<1xf32>
    %45 = vector.multi_reduction <add>, %44, %cst_20 [1, 2] : vector<1x8x128xf32> to vector<1xf32>
    %46 = vector.shape_cast %45 : vector<1xf32> to vector<1x1x1xf32>
    %47 = vector.extract %46[0, 0, 0] : f32 from vector<1x1x1xf32>
    %48 = vector.broadcast %47 : f32 to vector<1x1xf32>
    %49 = arith.addf %39, %48 : vector<1x1xf32>
    %c0_21 = arith.constant 0 : index
    %c0_22 = arith.constant 0 : index
    %50 = vector.load %arg9[%c0_21, %c0_22] : memref<1x1xf32, #tpu.memory_space<vmem>>, vector<1x1xf32>
    tpu.vector_store %arg9[%c0_21, %c0_22], %49 {strides = array<i32>} : memref<1x1xf32, #tpu.memory_space<vmem>>, vector<1x1xf32>,
    %c0_i32_23 = arith.constant 0 : i32
    %51 = arith.cmpi eq, %arg1, %c0_i32_23 : i32
    %52 = arith.extui %51 : i1 to i32
    %c0_i32_24 = arith.constant 0 : i32
    %53 = arith.cmpi ne, %52, %c0_i32_24 : i32
    scf.if %53 {
      %c0_26 = arith.constant 0 : index
      %c0_27 = arith.constant 0 : index
      %59 = vector.load %arg10[%c0_26, %c0_27] : memref<1x1xf32, #tpu.memory_space<vmem>>, vector<1x1xf32>
      %c-100_i32 = arith.constant -100 : i32
      %60 = vector.broadcast %c-100_i32 : i32 to vector<8x1xi32>
      %61 = arith.cmpi ne, %34, %60 : vector<8x1xi32>
      %62 = arith.extui %61 : vector<8x1xi1> to vector<8x1xi32>
      %63 = arith.sitofp %62 : vector<8x1xi32> to vector<8x1xf32>
      %64 = vector.shape_cast %63 : vector<8x1xf32> to vector<1x8x1xf32>
      %cst_28 = arith.constant dense<0.000000e+00> : vector<1xf32>
      %65 = vector.multi_reduction <add>, %64, %cst_28 [1, 2] : vector<1x8x1xf32> to vector<1xf32>
      %66 = vector.shape_cast %65 : vector<1xf32> to vector<1x1x1xf32>
      %67 = vector.extract %66[0, 0, 0] : f32 from vector<1x1x1xf32>
      %68 = vector.broadcast %67 : f32 to vector<1x1xf32>
      %69 = arith.addf %59, %68 : vector<1x1xf32>
      %c0_29 = arith.constant 0 : index
      %c0_30 = arith.constant 0 : index
      %70 = vector.load %arg10[%c0_29, %c0_30] : memref<1x1xf32, #tpu.memory_space<vmem>>, vector<1x1xf32>
      tpu.vector_store %arg10[%c0_29, %c0_30], %69 {strides = array<i32>} : memref<1x1xf32, #tpu.memory_space<vmem>>, vector<1x1xf32>,
    } else {
    }
    %c1_i32 = arith.constant 1 : i32
    %54 = arith.cmpi eq, %arg0, %c1_i32 : i32
    %c2_i32 = arith.constant 2 : i32
    %55 = arith.cmpi eq, %arg1, %c2_i32 : i32
    %56 = arith.andi %54, %55 : i1
    %57 = arith.extui %56 : i1 to i32
    %c0_i32_25 = arith.constant 0 : i32
    %58 = arith.cmpi ne, %57, %c0_i32_25 : i32
    scf.if %58 {
      %c0_26 = arith.constant 0 : index
      %c0_27 = arith.constant 0 : index
      %59 = vector.load %arg7[%c0_26, %c0_27] : memref<1x1xf32, #tpu.memory_space<vmem>>, vector<1x1xf32>
      %c0_28 = arith.constant 0 : index
      %c0_29 = arith.constant 0 : index
      %60 = vector.load %arg8[%c0_28, %c0_29] : memref<1x1xf32, #tpu.memory_space<vmem>>, vector<1x1xf32>
      %61 = math.log %60 : vector<1x1xf32>
      %62 = arith.addf %59, %61 : vector<1x1xf32>
      %c0_30 = arith.constant 0 : index
      %c0_31 = arith.constant 0 : index
      %63 = vector.load %arg9[%c0_30, %c0_31] : memref<1x1xf32, #tpu.memory_space<vmem>>, vector<1x1xf32>
      %c0_32 = arith.constant 0 : index
      %c0_33 = arith.constant 0 : index
      %64 = vector.load %arg10[%c0_32, %c0_33] : memref<1x1xf32, #tpu.memory_space<vmem>>, vector<1x1xf32>
      %65 = arith.divf %63, %64 : vector<1x1xf32>
      %66 = arith.subf %62, %65 : vector<1x1xf32>
      %c0_34 = arith.constant 0 : index
      %c0_35 = arith.constant 0 : index
      %67 = vector.load %arg6[%c0_34, %c0_35] : memref<1x1xf32, #tpu.memory_space<vmem>>, vector<1x1xf32>
      tpu.vector_store %arg6[%c0_34, %c0_35], %66 {strides = array<i32>} : memref<1x1xf32, #tpu.memory_space<vmem>>, vector<1x1xf32>,
    } else {
    }
    return
  }
  func.func @transform_0(%arg0: i32, %arg1: i32, %arg2: memref<1xf32, #tpu.memory_space<smem>>) -> (i32, i32) {
    %c0_i32 = arith.constant 0 : i32
    return %arg0, %arg1 : i32, i32
  }
  func.func @transform_1(%arg0: i32, %arg1: i32, %arg2: memref<1xf32, #tpu.memory_space<smem>>) -> (i32, i32) {
    %c0_i32 = arith.constant 0 : i32
    return %arg0, %arg1 : i32, i32
  }
  func.func @transform_2(%arg0: i32, %arg1: i32, %arg2: memref<1xf32, #tpu.memory_space<smem>>) -> (i32, i32) {
    %c0_i32 = arith.constant 0 : i32
    %c0_i32_0 = arith.constant 0 : i32
    return %arg0, %c0_i32 : i32, i32
  }
  func.func @transform_3(%arg0: i32, %arg1: i32, %arg2: memref<1xf32, #tpu.memory_space<smem>>) -> (i32, i32) {
    %c0_i32 = arith.constant 0 : i32
    %c0_i32_0 = arith.constant 0 : i32
    %c0_i32_1 = arith.constant 0 : i32
    return %c0_i32, %c0_i32_0 : i32, i32
  }
}

</mosaic_0001>

<llo_original>
// kernel: tpu_custom_call.1
$region0: #{tpu_custom_call.1}
  #allocation0 [shape = 'u32[]', space=smem, size = 0x4, offset = 0x4, fixed_abs, tag = 'smem constant byte address 0x4 - core index']
  #allocation1 [shape = 'u32[144,128]{1,0:T(1,128)}', space=vmem, size = 0x12000, scoped, tag = 'internal scratch']
  #allocation2 [shape = 'f32[1,1]{1,0:T(1,128)}', space=vmem, size = 0x200, scoped, tag = 'scratch operand']
  #allocation3 [shape = 'f32[1,1]{1,0:T(1,128)}', space=vmem, size = 0x200, scoped, tag = 'scratch operand']
  #allocation4 [shape = 'f32[1,1]{1,0:T(1,128)}', space=vmem, size = 0x200, scoped, tag = 'scratch operand']
  #allocation5 [shape = 'f32[1,1]{1,0:T(1,128)}', space=vmem, size = 0x200, scoped, tag = 'scratch operand']
  #allocation6 [shape = 's32[1]{0}', space=sflag, size = 0x4, scoped, tag = 'scoped memory for tpu_custom_call.1']
  #allocation7 [shape = 'f32[1]{0:T(128)S(6)}', space=smem, size = 0x200, scoped, tag = 'prefetched SMEM operand 0']
  %s0 = inlined_call_operand.<no memory space> [shape: f32[1], index: 0, kind: input, shape index: {}]
  %s1 = inlined_call_operand.hbm [shape: f32[16,384], index: 1, kind: input, shape index: {}]
  %s2 = inlined_call_operand.hbm [shape: f32[16,384], index: 2, kind: input, shape index: {}]
  %s3 = inlined_call_operand.vmem [shape: s32[16,1], index: 3, kind: input, shape index: {}]
  %s4 = inlined_call_operand.hbm [shape: f32[1,1], index: 4, kind: output, shape index: {}]
  %s5 = sld [smem:[#allocation0]]
  $region65: #{tpu_custom_call.1} parent=0
    _
  %s7 = ssub.s32 1, %s5
  %s8 = scalar_select 0, %s7, %s5
  %9 = sst [smem:[#allocation7]] %s0
  $region1: #{tpu_custom_call.1} parent=0
    #allocation8 [shape = 'u8[8192]{0}', space=vmem, size = 0x2000, scoped, tag = 'input window, operand 1']
    #allocation9 [shape = 's32[2]{0}', space=sflag, size = 0x8, scoped, tag = 'scoped memory for tpu_custom_call.1']
    #allocation10 [shape = 's32[2]{0}', space=sflag, size = 0x8, scoped, tag = 'scoped memory for tpu_custom_call.1']
    #allocation11 [shape = 'u8[8192]{0}', space=vmem, size = 0x2000, scoped, tag = 'input window, operand 2']
    #allocation12 [shape = 's32[2]{0}', space=sflag, size = 0x8, scoped, tag = 'scoped memory for tpu_custom_call.1']
    #allocation13 [shape = 'u8[512]{0}', space=vmem, size = 0x400, scoped, tag = 'output window, operand 0, single buffered']
    %10 = vsyncpa [#allocation9], 0
    %s11 = scalar_lea.sflag [#allocation9], 1
    %12 = vsyncpa %s11, 0
    %13 = vsyncpa [#allocation12], 0
    %s14 = scalar_lea.sflag [#allocation12], 1
    %15 = vsyncpa %s14, 0
    %16 = vsyncpa [#allocation10], 0
    loop: start=0, step=1, limit=8
    $region2: #{tpu_custom_call.1} parent=1 // loop_pre_header
      _
    $region3: #{tpu_custom_call.1} parent=1 // loop_header
      %s18 = sphi 0, %s22
      %p19 = scmp.ge.s32.totalorder %s18, 8
      %s25 = sphi 0, %s37
      %s26 = sphi 0, %s33
      %s27 = sphi 0, %s25
      %s28 = sphi 0, %s26
      %s29 = sphi 0, %s27
      %s30 = sphi 0, %s28
      %s42 = sphi 0, %s44
      %s45 = sphi 0, %s42
      %s46 = sphi 0, %s45
      %s62 = sphi 0, %s46
      %s70 = sphi 0, %s72
      %s73 = sphi 0, %s70
      %s74 = sphi 0, %s73
      %s90 = sphi 0, %s74
      %s96 = sphi 0, %s98
      %s99 = sphi 0, %s96
      %s100 = sphi 0, %s99
      %s116 = sphi 0, %s100
      %s120 = sphi 0, %s120
      %s122 = sphi 0, %s120
      %s123 = sphi 0, %s122
      %s137 = sphi 0, %s123
    $region4: #{tpu_custom_call.1} parent=1 // loop_header_branch
      %21 = sbr.rel (%p19) target = $region8
    $region5: #{tpu_custom_call.1} parent=1 // loop_body
      %s23 = ssub.s32 %s18, 1
      %s24 = ssub.s32 %s18, 2
      %s31 = sadd.s32 1, %s26
      %p32 = scmp.ge.s32.totalorder %s31, 3
      %s33 = scalar_select %p32, 0, %s31
      %s34 = sadd.s32 1, %s25
      %s35 = scalar_select %p32, %s34, %s25
      %p36 = scmp.ge.s32.totalorder %s35, 2
      %s37 = scalar_select %p36, 0, %s35
      %s38 = ssub.s32 %s25, %s37
      %s39 = ssub.s32 %s26, %s33
      %s40 = sor.u32 %s38, %s39
      %p41 = scmp.eq.s32.totalorder %s40, 0
      %s43 = sadd.s32 %s42, 1
      %s44 = scalar_select %p41, %s42, %s43
      %p47 = pneg %p41
      %p48 = scmp.eq.s32.totalorder %s18, 5
      %p49 = por %p47, %p48
      %p50 = scmp.ne.s32.totalorder %s42, %s45
      %p51 = scmp.eq.s32.totalorder %s18, 0
      %p52 = por %p50, %p51
      %p53 = scmp.ne.s32.totalorder %s42, %s45
      %p54 = scmp.eq.s32.totalorder %s23, 5
      %p55 = por %p53, %p54
      %p56 = scmp.ne.s32.totalorder %s45, %s46
      %p57 = scmp.eq.s32.totalorder %s23, 0
      %p58 = por %p56, %p57
      %p59 = scmp.ne.s32.totalorder %s45, %s46
      %p60 = scmp.eq.s32.totalorder %s24, 5
      %p61 = por %p59, %p60
      %p63 = scmp.ne.s32.totalorder %s46, %s62
      %p64 = scmp.eq.s32.totalorder %s24, 0
      %p65 = por %p63, %p64
      %s66 = ssub.s32 %s25, %s37
      %s67 = ssub.s32 %s26, %s33
      %s68 = sor.u32 %s66, %s67
      %p69 = scmp.eq.s32.totalorder %s68, 0
      %s71 = sadd.s32 %s70, 1
      %s72 = scalar_select %p69, %s70, %s71
      %p75 = pneg %p69
      %p76 = scmp.eq.s32.totalorder %s18, 5
      %p77 = por %p75, %p76
      %p78 = scmp.ne.s32.totalorder %s70, %s73
      %p79 = scmp.eq.s32.totalorder %s18, 0
      %p80 = por %p78, %p79
      %p81 = scmp.ne.s32.totalorder %s70, %s73
      %p82 = scmp.eq.s32.totalorder %s23, 5
      %p83 = por %p81, %p82
      %p84 = scmp.ne.s32.totalorder %s73, %s74
      %p85 = scmp.eq.s32.totalorder %s23, 0
      %p86 = por %p84, %p85
      %p87 = scmp.ne.s32.totalorder %s73, %s74
      %p88 = scmp.eq.s32.totalorder %s24, 5
      %p89 = por %p87, %p88
      %p91 = scmp.ne.s32.totalorder %s74, %s90
      %p92 = scmp.eq.s32.totalorder %s24, 0
      %p93 = por %p91, %p92
      %s94 = ssub.s32 %s25, %s37
      %p95 = scmp.eq.s32.totalorder %s94, 0
      %s97 = sadd.s32 %s96, 1
      %s98 = scalar_select %p95, %s96, %s97
      %p101 = pneg %p95
      %p102 = scmp.eq.s32.totalorder %s18, 5
      %p103 = por %p101, %p102
      %p104 = scmp.ne.s32.totalorder %s96, %s99
      %p105 = scmp.eq.s32.totalorder %s18, 0
      %p106 = por %p104, %p105
      %p107 = scmp.ne.s32.totalorder %s96, %s99
      %p108 = scmp.eq.s32.totalorder %s23, 5
      %p109 = por %p107, %p108
      %p110 = scmp.ne.s32.totalorder %s99, %s100
      %p111 = scmp.eq.s32.totalorder %s23, 0
      %p112 = por %p110, %p111
      %p113 = scmp.ne.s32.totalorder %s99, %s100
      %p114 = scmp.eq.s32.totalorder %s24, 5
      %p115 = por %p113, %p114
      %p117 = scmp.ne.s32.totalorder %s100, %s116
      %p118 = scmp.eq.s32.totalorder %s24, 0
      %p119 = por %p117, %p118
      %s121 = sadd.s32 %s120, 1
      %p124 = scmp.eq.s32.totalorder %s18, 5
      %p125 = scmp.ne.s32.totalorder %s120, %s122
      %p126 = scmp.eq.s32.totalorder %s18, 0
      %p127 = por %p125, %p126
      %p128 = scmp.ne.s32.totalorder %s120, %s122
      %p129 = scmp.eq.s32.totalorder %s23, 5
      %p130 = por %p128, %p129
      %p131 = scmp.ne.s32.totalorder %s122, %s123
      %p132 = scmp.eq.s32.totalorder %s23, 0
      %p133 = por %p131, %p132
      %p134 = scmp.ne.s32.totalorder %s122, %s123
      %p135 = scmp.eq.s32.totalorder %s24, 5
      %p136 = por %p134, %p135
      %p138 = scmp.ne.s32.totalorder %s123, %s137
      %p139 = scmp.eq.s32.totalorder %s24, 0
      %p140 = por %p138, %p139
      %p141 = scmp.le.s32.totalorder 1, %s18
      %p142 = scmp.lt.s32.totalorder %s18, 7
      %p143 = pnand %p141, %p142
      %p144 = pneg %p143
      // Predicated region
      $region9: #{tpu_custom_call.1} parent=5 // pred_check
        _
      $region10: #{tpu_custom_call.1} parent=5 // pred_check_branch
        %146 = sbr.rel (%p143) target = $region12
      $region11: #{tpu_custom_call.1} parent=5 // pred_region
        %s147 = ssub.s32 %s18, 1
      $region12: #{tpu_custom_call.1} parent=5 // pred_fallthru
        _
      %p148 = scmp.lt.s32.totalorder %s18, 6
      // Predicated region
      $region13: #{tpu_custom_call.1} parent=5 // pred_check
        %p149 = pneg %p148
      $region14: #{tpu_custom_call.1} parent=5 // pred_check_branch
        %151 = sbr.rel (%p149) target = $region16
      $region15: #{tpu_custom_call.1} parent=5 // pred_region
        // Predicated region
        $region17: #{tpu_custom_call.1} parent=15 // pred_check
          %p152 = pneg %p52
        $region18: #{tpu_custom_call.1} parent=15 // pred_check_branch
          %154 = sbr.rel (%p152) target = $region20
        $region19: #{tpu_custom_call.1} parent=15 // pred_region
          %s155 = sand.u32 %s42, 1
          %s156 = scalar_lea.sflag [#allocation9], %s155
          %s157 = sand.u32 %s42, 1
          %s158 = smul.addr %s157, 8
          %s159 = scalar_lea.vmem [#allocation8], %s158
          %s161 = ssub.s32 128, 128
          %162 = vsyncadd %s156, %s161
          %s163 = smul.addr %s25, 3
          %s164 = sadd.s32 %s26, %s163
          %s165 = smul.addr %s164, 128
          %s166 = scalar_lea.hbm %s1, %s165
          %s168 = sshll.u32 %s159, 4
          %s169 = int_to_ptr.vmem [resolvable:$true] %s168
          %171 = dma.hbm_to_vmem [thread:$0]  %s166, 128, %s169, %s156
        $region20: #{tpu_custom_call.1} parent=15 // pred_fallthru
          _
        // Predicated region
        $region21: #{tpu_custom_call.1} parent=15 // pred_check
          %p172 = pneg %p80
        $region22: #{tpu_custom_call.1} parent=15 // pred_check_branch
          %174 = sbr.rel (%p172) target = $region24
        $region23: #{tpu_custom_call.1} parent=15 // pred_region
          %s175 = sand.u32 %s70, 1
          %s176 = scalar_lea.sflag [#allocation12], %s175
          %s177 = sand.u32 %s70, 1
          %s178 = smul.addr %s177, 8
          %s179 = scalar_lea.vmem [#allocation11], %s178
          %s181 = ssub.s32 128, 128
          %182 = vsyncadd %s176, %s181
          %s183 = smul.addr %s25, 3
          %s184 = sadd.s32 %s26, %s183
          %s185 = smul.addr %s184, 128
          %s186 = scalar_lea.hbm %s2, %s185
          %s188 = sshll.u32 %s179, 4
          %s189 = int_to_ptr.vmem [resolvable:$true] %s188
          %191 = dma.hbm_to_vmem [thread:$0]  %s186, 128, %s189, %s176
        $region24: #{tpu_custom_call.1} parent=15 // pred_fallthru
          _
        // Predicated region
        $region25: #{tpu_custom_call.1} parent=15 // pred_check
          %p192 = pneg %p106
        $region26: #{tpu_custom_call.1} parent=15 // pred_check_branch
          %194 = sbr.rel (%p192) target = $region28
        $region27: #{tpu_custom_call.1} parent=15 // pred_region
          %p195 = scmp.lt.s32.totalorder %s25, 1
          %s196 = scalar_select %p195, %s25, 1
          %s197 = smul.addr %s196, 8
          %s198 = scalar_lea.vmem %s3, %s197
        $region28: #{tpu_custom_call.1} parent=15 // pred_fallthru
          _
      $region16: #{tpu_custom_call.1} parent=5 // pred_fallthru
        _
      %p199 = scmp.le.s32.totalorder 1, %s18
      %p200 = scmp.lt.s32.totalorder %s18, 7
      %p201 = pnand %p199, %p200
      %p202 = pneg %p201
      // Predicated region
      $region29: #{tpu_custom_call.1} parent=5 // pred_check
        _
      $region30: #{tpu_custom_call.1} parent=5 // pred_check_branch
        %204 = sbr.rel (%p201) target = $region32
      $region31: #{tpu_custom_call.1} parent=5 // pred_region
        %s205 = ssub.s32 %s18, 1
        %s206 = sand.u32 %s45, 1
        %s207 = scalar_lea.sflag [#allocation9], %s206
        %s208 = sand.u32 %s45, 1
        %s209 = smul.addr %s208, 8
        %s210 = scalar_lea.vmem [#allocation8], %s209
        // Predicated region
        $region33: #{tpu_custom_call.1} parent=31 // pred_check
          %p211 = pneg %p58
        $region34: #{tpu_custom_call.1} parent=31 // pred_check_branch
          %213 = sbr.rel (%p211) target = $region36
        $region35: #{tpu_custom_call.1} parent=31 // pred_region
          %214 = dma.done %s207, 128
        $region36: #{tpu_custom_call.1} parent=31 // pred_fallthru
          _
        %s215 = sand.u32 %s73, 1
        %s216 = scalar_lea.sflag [#allocation12], %s215
        %s217 = sand.u32 %s73, 1
        %s218 = smul.addr %s217, 8
        %s219 = scalar_lea.vmem [#allocation11], %s218
        // Predicated region
        $region37: #{tpu_custom_call.1} parent=31 // pred_check
          %p220 = pneg %p86
        $region38: #{tpu_custom_call.1} parent=31 // pred_check_branch
          %222 = sbr.rel (%p220) target = $region40
        $region39: #{tpu_custom_call.1} parent=31 // pred_region
          %223 = dma.done %s216, 128
        $region40: #{tpu_custom_call.1} parent=31 // pred_fallthru
          _
        %s224 = sand.u32 %s45, 1
        %s225 = scalar_lea.sflag [#allocation9], %s224
        %s226 = sand.u32 %s45, 1
        %s227 = smul.addr %s226, 8
        %s228 = scalar_lea.vmem [#allocation8], %s227
        %p229 = pneg %p58
        %p230 = pneg %p55
        %s231 = sand.u32 %s73, 1
        %s232 = scalar_lea.sflag [#allocation12], %s231
        %s233 = sand.u32 %s73, 1
        %s234 = smul.addr %s233, 8
        %s235 = scalar_lea.vmem [#allocation11], %s234
        %p236 = pneg %p86
        %p237 = pneg %p83
        %p238 = scmp.lt.s32.totalorder %s27, 1
        %s239 = scalar_select %p238, %s27, 1
        %s240 = smul.addr %s239, 8
        %s241 = scalar_lea.vmem %s3, %s240
        %p242 = pneg %p112
        %p243 = pneg %p109
        %p244 = pneg %p133
        %p245 = pneg %p130
        %p246 = scmp.lt.s32.totalorder %s27, 1
        %s247 = scalar_select %p246, %s27, 1
        %s248 = smul.addr %s247, 8
        %s249 = scalar_lea.vmem %s3, %s248
        %p250 = scmp.eq.s32.totalorder %s27, 0
        %p251 = scmp.eq.s32.totalorder %s28, 0
        %p252 = pnand %p250, %p251
        %p253 = pneg %p252
        // Predicated region
        $region41: #{tpu_custom_call.1} parent=31 // pred_check
          _
        $region42: #{tpu_custom_call.1} parent=31 // pred_check_branch
          %255 = sbr.rel (%p252) target = $region44
        $region43: #{tpu_custom_call.1} parent=31 // pred_region
          %vm256 = vcmask 0
          %257 = vst.msk [vmem:[#allocation2] sm:$0x1] %vm256, -inf
          %258 = vst.msk [vmem:[#allocation3] sm:$0x1] %vm256, 0.0
          %259 = vst.msk [vmem:[#allocation4] sm:$0x1] %vm256, 0.0
          %260 = vst.msk [vmem:[#allocation5] sm:$0x1] %vm256, 0.0
        $region44: #{tpu_custom_call.1} parent=31 // pred_fallthru
          _
        %s261 = sld [smem:[#allocation7]]
        %v262 = vld [vmem:[%s210] sm:$0xff]
        %v263 = vld [vmem:[%s219] sm:$0xff]
        %v264 = vsub.f32 %v262, %v263
        %v265 = vstv %s261
        %v266 = vmul.f32 %v265, %v264
        %v267 = vadd.f32 %v262, %v266
        %v268 = vld [vmem:[#allocation2] sm:$0x1]
        %269 = vmax.xlane.f32.xlu0 %v267
        %v270 = vpop.xlane.xlu0 %269
        %v271 = vrot.slane %v270, 4
        %v272 = vmax.f32 %v270, %v271
        %v273 = vrot.slane %v272, 2
        %v274 = vmax.f32 %v272, %v273
        %v275 = vrot.slane %v274, 1
        %v276 = vmax.f32 %v274, %v275
        %s277 = vtos %v276
        %v278 = vstv %s277
        %v279 = vmax.f32 %v268, %v278
        %v280 = vld [vmem:[#allocation3] sm:$0x1]
        %v281 = vsub.f32 %v268, %v279
        %v282 = vmul.f32 %v281, 1.442695
        %v283 = vpow.pop %v282
        %v284 = vmul.f32 %v280, %v283
        %v286 = vlaneseq
        %v287 = vshrl.u32 %v286, 7
        %v288 = vsub.s32 0, %v287
        %v289 = vrot.slane %v279, %v288
        %290 = vset.pattern.permute.xlu0 0
        %291 = vperm.xlu0 %290, %v289
        %v292 = vpop.permute.xlu0 %291
        %v294 = vsub.f32 %v267, %v292
        %v295 = vmul.f32 %v294, 1.442695
        %v296 = vpow.pop %v295
        %297 = vadd.xlane.f32.xlu0 %v296
        %v298 = vpop.xlane.xlu0 %297
        %v299 = vrot.slane %v298, 4
        %v300 = vadd.f32 %v298, %v299
        %v301 = vrot.slane %v300, 2
        %v302 = vadd.f32 %v300, %v301
        %v303 = vrot.slane %v302, 1
        %v304 = vadd.f32 %v302, %v303
        %s305 = vtos %v304
        %v306 = vstv %s305
        %v307 = vadd.f32 %v284, %v306
        %vm308 = vcmask 0
        %309 = vst.msk [vmem:[#allocation3] sm:$0x1] %vm308, %v307
        %310 = vst.msk [vmem:[#allocation2] sm:$0x1] %vm308, %v279
        %v311 = vld [vmem:[%s249] sm:$0xff]
        %s312 = smul.u32 %s28, 128
        %v313 = vlaneseq
        %v314 = vand.u32 %v313, 127
        %v315 = vstv %s312
        %v316 = vadd.s32 %v315, %v314
        %v317 = vld [vmem:[#allocation4] sm:$0x1]
        %318 = vset.pattern.permute.xlu0 0
        %319 = vperm.xlu0 %318, %v311
        %v320 = vpop.permute.xlu0 %319
        %vm321 = vcmp.eq.s32.totalorder %v316, %v320
        %v322 = vsel %vm321, %v267, 0.0
        %323 = vadd.xlane.f32.xlu0 %v322
        %v324 = vpop.xlane.xlu0 %323
        %v325 = vrot.slane %v324, 4
        %v326 = vadd.f32 %v324, %v325
        %v327 = vrot.slane %v326, 2
        %v328 = vadd.f32 %v326, %v327
        %v329 = vrot.slane %v328, 1
        %v330 = vadd.f32 %v328, %v329
        %s331 = vtos %v330
        %v332 = vstv %s331
        %v333 = vadd.f32 %v317, %v332
        %334 = vst.msk [vmem:[#allocation4] sm:$0x1] %vm308, %v333
        // Predicated region
        $region45: #{tpu_custom_call.1} parent=31 // pred_check
          %p335 = pneg %p251
        $region46: #{tpu_custom_call.1} parent=31 // pred_check_branch
          %337 = sbr.rel (%p335) target = $region48
        $region47: #{tpu_custom_call.1} parent=31 // pred_region
          %v338 = vld [vmem:[#allocation5] sm:$0x1]
          %vm339 = vcmp.ne.s32.totalorder %v311, 4294967196
          %v340 = vsel %vm339, 1, 0
          %v341 = vcvt.s32.f32 %v340
          %vm342 = vcmask 7168
          %v343 = vsel %vm342, %v341, 0.0
          %344 = vadd.xlane.f32.xlu0 %v343
          %v345 = vpop.xlane.xlu0 %344
          %v346 = vrot.slane %v345, 4
          %v347 = vadd.f32 %v345, %v346
          %v348 = vrot.slane %v347, 2
          %v349 = vadd.f32 %v347, %v348
          %v350 = vrot.slane %v349, 1
          %v351 = vadd.f32 %v349, %v350
          %s352 = vtos %v351
          %v353 = vstv %s352
          %v354 = vadd.f32 %v338, %v353
          %355 = vst.msk [vmem:[#allocation5] sm:$0x1] %vm308, %v354
        $region48: #{tpu_custom_call.1} parent=31 // pred_fallthru
          _
        %p356 = scmp.eq.s32.totalorder %s27, 1
        %p357 = scmp.eq.s32.totalorder %s28, 2
        %p358 = pnand %p356, %p357
        %p359 = pneg %p358
        // Predicated region
        $region49: #{tpu_custom_call.1} parent=31 // pred_check
          _
        $region50: #{tpu_custom_call.1} parent=31 // pred_check_branch
          %361 = sbr.rel (%p358) target = $region52
        $region51: #{tpu_custom_call.1} parent=31 // pred_region
          %v362 = vld [vmem:[#allocation2] sm:$0x1]
          %v363 = vld [vmem:[#allocation3] sm:$0x1]
          %v364 = vlog2.pop %v363
          %v365 = vmul.f32 %v364, 0.6931472
          %v366 = vadd.f32 %v362, %v365
          %v367 = vld [vmem:[#allocation4] sm:$0x1]
          %v368 = vld [vmem:[#allocation5] sm:$0x1]
          %v369 = vrcp.pop %v368
          %v370 = vmul.f32 %v367, %v369
          %v371 = vsub.f32 %v366, %v370
          %372 = vst.msk [vmem:[#allocation13] sm:$0x1] %vm308, %v371
        $region52: #{tpu_custom_call.1} parent=31 // pred_fallthru
          _
        // Predicated region
        $region53: #{tpu_custom_call.1} parent=31 // pred_check
          %p373 = pneg %p130
        $region54: #{tpu_custom_call.1} parent=31 // pred_check_branch
          %375 = sbr.rel (%p373) target = $region56
        $region55: #{tpu_custom_call.1} parent=31 // pred_region
          %s377 = ssub.s32 16, 16
          %378 = vsyncadd [#allocation10], %s377
          %s380 = sshll.u32 [#allocation13], 4
          %s381 = int_to_ptr.vmem [resolvable:$true] %s380
          %383 = dma.vmem_to_hbm [thread:$0]  %s381, 16, %s4, [#allocation10]
        $region56: #{tpu_custom_call.1} parent=31 // pred_fallthru
          _
        // Predicated region
        $region57: #{tpu_custom_call.1} parent=31 // pred_check
          %p384 = pneg %p130
        $region58: #{tpu_custom_call.1} parent=31 // pred_check_branch
          %386 = sbr.rel (%p384) target = $region60
        $region59: #{tpu_custom_call.1} parent=31 // pred_region
          %387 = dma.done [#allocation10], 16
        $region60: #{tpu_custom_call.1} parent=31 // pred_fallthru
          _
      $region32: #{tpu_custom_call.1} parent=5 // pred_fallthru
        _
      %p388 = scmp.le.s32.totalorder 2, %s18
      // Predicated region
      $region61: #{tpu_custom_call.1} parent=5 // pred_check
        %p389 = pneg %p388
      $region62: #{tpu_custom_call.1} parent=5 // pred_check_branch
        %391 = sbr.rel (%p389) target = $region64
      $region63: #{tpu_custom_call.1} parent=5 // pred_region
        %s392 = ssub.s32 %s18, 2
      $region64: #{tpu_custom_call.1} parent=5 // pred_fallthru
        _
    $region6: #{tpu_custom_call.1} parent=1 // loop_footer
      %s22 = sadd.s32 1, %s18
    $region7: #{tpu_custom_call.1} parent=1 // loop_footer_branch
      %17 = sbr.rel target = $region3
    $region8: #{tpu_custom_call.1} parent=1 // loop_exit
      _
    %393 = vsyncpa [#allocation9], 1
    %s394 = scalar_lea.sflag [#allocation9], 1
    %395 = vsyncpa %s394, 1
    %396 = vsyncpa [#allocation12], 1
    %s397 = scalar_lea.sflag [#allocation12], 1
    %398 = vsyncpa %s397, 1
    %399 = vsyncpa [#allocation10], 1
    %s400 = scalar_lea.sflag [#allocation10], 1
    %401 = vsyncpa %s400, 1

</llo_original>
